<compile_context>
chip_gen: v6e
topology: v6e:2x2x1
jax: 0.10.0
libtpu: 0.0.40
codegen_flags: <defaults>
</compile_context>

<pallas_src>
import math
import functools

import jax
import jax.numpy as jnp
from jax.experimental import pallas as pl
from jax.experimental.pallas import tpu as pltpu


# ---------------------------------------------------------------------------
# Positional table construction (done once at init — parameter setup glue).
# ---------------------------------------------------------------------------
def make_pos_embedding(emb_size: int, maxlen: int = 5000,
                       dtype=jnp.float32) -> jnp.ndarray:
    """Replicates the buffer built in PositionalEncoding.__init__."""
    den = jnp.exp(
        -jnp.arange(0, emb_size, 2, dtype=jnp.float32) * math.log(10000.0) / emb_size
    )
    pos = jnp.arange(0, maxlen, dtype=jnp.float32).reshape(maxlen, 1)
    pe = jnp.zeros((maxlen, emb_size), dtype=jnp.float32)
    pe = pe.at[:, 0::2].set(jnp.sin(pos * den))
    pe = pe.at[:, 1::2].set(jnp.cos(pos * den))
    return pe[:, None, :].astype(dtype)  # (maxlen, 1, emb_size)


# ---------------------------------------------------------------------------
# Kernels (lane-dense layout: x/out blocks are (TS, B*E), pe block is (TS, E)).
# ---------------------------------------------------------------------------
def _pe_add_kernel(x_ref, pe_ref, o_ref, *, batch):
    pe = jnp.tile(pe_ref[...], (1, batch))            # (TS, E) -> (TS, B*E)
    o_ref[...] = (x_ref[...] + pe).astype(o_ref.dtype)


def _pe_dropout_bits_kernel(x_ref, pe_ref, bits_ref, o_ref, *,
                            batch, threshold, scale):
    # Portable dropout path: uint32 mask bits precomputed outside the kernel.
    pe = jnp.tile(pe_ref[...], (1, batch))
    y = x_ref[...] + pe
    keep = bits_ref[...] >= jnp.uint32(threshold)      # integer-threshold compare
    y = jnp.where(keep, y * jnp.asarray(scale, y.dtype), jnp.zeros_like(y))
    o_ref[...] = y.astype(o_ref.dtype)


def _pe_dropout_hw_kernel(seed_ref, x_ref, pe_ref, o_ref, *,
                          batch, threshold, scale):
    # TPU path: mask bits from the in-kernel hardware PRNG (no extra HBM read).
    pe = jnp.tile(pe_ref[...], (1, batch))
    y = x_ref[...] + pe
    # Per-tile stream; int32 wrap for huge seeds/grids is statistically harmless.
    pltpu.prng_seed(seed_ref[0] * pl.num_programs(0) + pl.program_id(0))
    bits = pltpu.prng_random_bits(y.shape)
    if bits.dtype != jnp.uint32:
        bits = pltpu.bitcast(bits, jnp.uint32)
    keep = bits >= jnp.uint32(threshold)
    y = jnp.where(keep, y * jnp.asarray(scale, y.dtype), jnp.zeros_like(y))
    o_ref[...] = y.astype(o_ref.dtype)


# ---------------------------------------------------------------------------
# Generation-aware sizing helpers
# ---------------------------------------------------------------------------
def _vmem_capacity_bytes() -> int:
    try:
        return int(pltpu.get_tpu_info().vmem_capacity_bytes)
    except Exception:
        return 64 * 1024 * 1024  # conservative (v7x per-TC physical)


def _round_up(x: int, m: int) -> int:
    return ((x + m - 1) // m) * m


# ---------------------------------------------------------------------------
# Wrapper
# ---------------------------------------------------------------------------
def positional_encoding_forward(
    token_embedding: jnp.ndarray,   # (S, B, E)
    pos_embedding: jnp.ndarray,     # (maxlen, 1, E)
    dropout_p: float,
    seed: int = 0,
    training: bool = True,
    block_s: int | None = None,
) -> jnp.ndarray:
    S, B, E = token_embedding.shape
    maxlen = pos_embedding.shape[0]
    assert maxlen >= S, "sequence longer than positional table"

    dtype = token_embedding.dtype
    itemsize = jnp.dtype(dtype).itemsize

    apply_dropout = training and float(dropout_p) > 0.0
    use_hw_prng = jax.default_backend() == "tpu"
    needs_bits = apply_dropout and not use_hw_prng

    # Lane-dense views: (S, B*E) for x/out, (rows, E) for the positional table.
    x2 = token_embedding.reshape(S, B * E)
    pe2 = pos_embedding.reshape(maxlen, E)
    if pe2.dtype != dtype:
        # Cast once in the wrapper (hoist to init in a real model); slice first
        # so we only touch the S rows actually used.
        pe2 = pe2[:S].astype(dtype)

    # ----- generation-aware VMEM budget and block size -----
    vmem_cap = _vmem_capacity_bytes()
    if vmem_cap >= 128 * 1024 * 1024:          # v5e / v6e (128 MiB physical)
        vmem_limit = 64 * 1024 * 1024
    else:                                      # v7x (64 MiB physical per TC)
        vmem_limit = 32 * 1024 * 1024

    if block_s is None:
        # Full pipelined footprint per sequence row: double-buffered
        # x block + out block + pe block (+ bits block on the fallback path).
        bytes_per_row = (
            2 * B * E * itemsize               # x + out
            + E * itemsize                     # pe
            + (B * E * 4 if needs_bits else 0) # uint32 mask bits
        )
        pipelined_per_row = 2 * bytes_per_row  # double buffering
        budget = vmem_limit // 2               # target ~50% of the limit
        rows = max(8, budget // max(1, pipelined_per_row))
        rows = (rows // 8) * 8                 # sublane-aligned tile rows
        if rows >= S:
            block_s = S
            if S >= 16:
                # Guarantee >= 2 tiles so both v7x TensorCores get work
                # (no-op on v5e/v6e single-core chips).
                block_s = _round_up(-(-S // 2), 8)
        else:
            block_s = rows
    block_s = max(1, min(block_s, S))

    grid = (pl.cdiv(S, block_s),)

    # index_map signature works with and without the scalar-prefetch arg.
    x_spec = pl.BlockSpec((block_s, B * E), lambda i, *_: (i, 0))
    pe_spec = pl.BlockSpec((block_s, E), lambda i, *_: (i, 0))
    out_spec = pl.BlockSpec((block_s, B * E), lambda i, *_: (i, 0))

    compiler_params = pltpu.CompilerParams(
        dimension_semantics=("parallel",),     # independent seq tiles
        vmem_limit_bytes=vmem_limit,
    )
    out_shape = jax.ShapeDtypeStruct((S, B * E), dtype)

    if not apply_dropout:
        out2 = pl.pallas_call(
            functools.partial(_pe_add_kernel, batch=B),
            out_shape=out_shape,
            grid=grid,
            in_specs=[x_spec, pe_spec],
            out_specs=out_spec,
            compiler_params=compiler_params,
        )(x2, pe2)
        return out2.reshape(S, B, E)

    p = float(dropout_p)
    threshold = min(int(round(p * 2.0 ** 32)), 2 ** 32 - 1)  # drop if bits < threshold
    scale = 1.0 / (1.0 - p)

    if use_hw_prng:
        # In-kernel hardware PRNG: no extra HBM traffic for the mask.
        kernel = functools.partial(
            _pe_dropout_hw_kernel, batch=B, threshold=threshold, scale=scale)
        seed_arr = jnp.array([seed], dtype=jnp.int32)
        out2 = pl.pallas_call(
            kernel,
            out_shape=out_shape,
            grid_spec=pltpu.PrefetchScalarGridSpec(
                num_scalar_prefetch=1,
                grid=grid,
                in_specs=[x_spec, pe_spec],
                out_specs=out_spec,
            ),
            compiler_params=compiler_params,
        )(seed_arr, x2, pe2)
        return out2.reshape(S, B, E)

    # Portable fallback (e.g. CPU interpret — pltpu.prng_seed has no lowering
    # there): stream precomputed uint32 mask bits through the same pipeline.
    bits = jax.random.bits(jax.random.PRNGKey(seed), (S, B * E), dtype=jnp.uint32)
    kernel = functools.partial(
        _pe_dropout_bits_kernel, batch=B, threshold=threshold, scale=scale)
    bits_spec = pl.BlockSpec((block_s, B * E), lambda i, *_: (i, 0))
    out2 = pl.pallas_call(
        kernel,
        out_shape=out_shape,
        grid=grid,
        in_specs=[x_spec, pe_spec, bits_spec],
        out_specs=out_spec,
        compiler_params=compiler_params,
    )(x2, pe2, bits)
    return out2.reshape(S, B, E)


# TODO(synk): PyTorch's nn.Dropout RNG stream (torch.bernoulli) is not reproduced
# bit-exactly; dropout here is statistically equivalent (keep prob 1-p, 1/(1-p) scaling).

if __name__ == "__main__":
    # Small shapes consistent with the module: seq=8, batch=2, emb=32.
    S, B, E = 8, 2, 32
    dropout_p = 0.1
    maxlen = 64

    key = jax.random.PRNGKey(0)
    x = jax.random.normal(key, (S, B, E), dtype=jnp.float32)

    pos_embedding = make_pos_embedding(E, maxlen, dtype=x.dtype)
    ref_eval = x + pos_embedding[:S]

    # Eval-mode (dropout = identity): must match x + pe.
    out_eval = positional_encoding_forward(x, pos_embedding, dropout_p, training=False)
    out_eval = jax.block_until_ready(out_eval)
    assert out_eval.shape == (S, B, E)
    assert jnp.allclose(out_eval, ref_eval, atol=1e-6), "eval-mode mismatch"

    # Training mode: every element is either exactly dropped (0) or scaled by 1/(1-p).
    out_train = positional_encoding_forward(
        x, pos_embedding, dropout_p, seed=123, training=True
    )
    out_train = jax.block_until_ready(out_train)
    scaled_ref = ref_eval / (1.0 - dropout_p)
    is_zero = jnp.isclose(out_train, 0.0)
    is_scaled = jnp.isclose(out_train, scaled_ref, atol=1e-5)
    assert bool(jnp.all(is_zero | is_scaled)), "training-mode dropout invariant failed"
    assert out_train.shape == (S, B, E)

    print("KERNEL_OK")
</pallas_src>

<mosaic_0001>
module attributes {stable_mosaic.version = 11 : i64} {
  func.func @_pe_add_kernel(%arg0: i32, %arg1: memref<8x64xf32, #tpu.memory_space<vmem>>, %arg2: memref<8x32xf32, #tpu.memory_space<vmem>>, %arg3: memref<8x64xf32, #tpu.memory_space<vmem>>) attributes {dimension_semantics = [#tpu.dimension_semantics<parallel>], iteration_bounds = array<i64: 1>, scalar_prefetch = 0 : i64, scratch_operands = 0 : i64, tpu.core_type = #tpu.core_type<tc>, window_params = [{transform_indices = @transform_0, window_bounds = array<i64: 8, 64>}, {transform_indices = @transform_1, window_bounds = array<i64: 8, 32>}, {transform_indices = @transform_2, window_bounds = array<i64: 8, 64>}]} {
    %c0 = arith.constant 0 : index
    %c0_0 = arith.constant 0 : index
    %0 = vector.load %arg2[%c0, %c0_0] : memref<8x32xf32, #tpu.memory_space<vmem>>, vector<8x32xf32>
    %1 = tpu.concatenate %0, %0 in 1 : vector<8x32xf32>, vector<8x32xf32> -> vector<8x64xf32>
    %c0_1 = arith.constant 0 : index
    %c0_2 = arith.constant 0 : index
    %2 = vector.load %arg1[%c0_1, %c0_2] : memref<8x64xf32, #tpu.memory_space<vmem>>, vector<8x64xf32>
    %3 = arith.addf %2, %1 : vector<8x64xf32>
    %c0_3 = arith.constant 0 : index
    %c0_4 = arith.constant 0 : index
    %4 = vector.load %arg3[%c0_3, %c0_4] : memref<8x64xf32, #tpu.memory_space<vmem>>, vector<8x64xf32>
    tpu.vector_store %arg3[%c0_3, %c0_4], %3 {strides = array<i32>} : memref<8x64xf32, #tpu.memory_space<vmem>>, vector<8x64xf32>,
    return
  }
  func.func @transform_0(%arg0: i32) -> (i32, i32) {
    %c0_i32 = arith.constant 0 : i32
    %c0_i32_0 = arith.constant 0 : i32
    return %arg0, %c0_i32 : i32, i32
  }
  func.func @transform_1(%arg0: i32) -> (i32, i32) {
    %c0_i32 = arith.constant 0 : i32
    %c0_i32_0 = arith.constant 0 : i32
    return %arg0, %c0_i32 : i32, i32
  }
  func.func @transform_2(%arg0: i32) -> (i32, i32) {
    %c0_i32 = arith.constant 0 : i32
    %c0_i32_0 = arith.constant 0 : i32
    return %arg0, %c0_i32 : i32, i32
  }
}

</mosaic_0001>

<llo_original>
// kernel: tpu_custom_call.1
$region0: #{tpu_custom_call.1}
  #allocation0 [shape = 'u32[]', space=smem, size = 0x4, offset = 0x4, fixed_abs, tag = 'smem constant byte address 0x4 - core index']
  #allocation1 [shape = 'u32[144,128]{1,0:T(1,128)}', space=vmem, size = 0x12000, scoped, tag = 'internal scratch']
  %s0 = inlined_call_operand.vmem [shape: f32[8,64], index: 0, kind: input, shape index: {}]
  %s1 = inlined_call_operand.vmem [shape: f32[64,32], index: 1, kind: input, shape index: {}]
  %s2 = inlined_call_operand.hbm [shape: f32[8,64], index: 2, kind: output, shape index: {}]
  %s3 = sld [smem:[#allocation0]]
  $region18: #{tpu_custom_call.1} parent=0
    _
  %s5 = ssub.s32 1, %s3
  %s6 = scalar_select 0, %s5, %s3
  $region1: #{tpu_custom_call.1} parent=0
    #allocation2 [shape = 'u8[4096]{0}', space=vmem, size = 0x1000, scoped, tag = 'output window, operand 0, single buffered']
    #allocation3 [shape = 's32[1]{0}', space=sflag, size = 0x4, scoped, tag = 'scoped memory for tpu_custom_call.1']
    %7 = vsyncpa [#allocation3], 0
    // Predicated region
    $region2: #{tpu_custom_call.1} parent=1 // pred_check
      _
    $region3: #{tpu_custom_call.1} parent=1 // pred_check_branch
      %9 = sbr.rel (0) target = $region5
    $region4: #{tpu_custom_call.1} parent=1 // pred_region
      _
    $region5: #{tpu_custom_call.1} parent=1 // pred_fallthru
      _
    // Predicated region
    $region6: #{tpu_custom_call.1} parent=1 // pred_check
      _
    $region7: #{tpu_custom_call.1} parent=1 // pred_check_branch
      %11 = sbr.rel (0) target = $region9
    $region8: #{tpu_custom_call.1} parent=1 // pred_region
      _
    $region9: #{tpu_custom_call.1} parent=1 // pred_fallthru
      _
    %v12 = vld [vmem:[%s1] sm:$0xff]
    %14 = vrot.lane.b32.xlu0 %v12, 32
    %v15 = vpop.permute.xlu0 %14
    %vm17 = vcmask 261120
    %v18 = vsel %vm17, %v12, %v15
    %v19 = vld [vmem:[%s0] sm:$0xff]
    %v20 = vadd.f32 %v19, %v18
    %vm21 = vcmask 523264
    %22 = vst.msk [vmem:[#allocation2] sm:$0xff] %vm21, %v20
    // Predicated region
    $region10: #{tpu_custom_call.1} parent=1 // pred_check
      _
    $region11: #{tpu_custom_call.1} parent=1 // pred_check_branch
      %24 = sbr.rel (0) target = $region13
    $region12: #{tpu_custom_call.1} parent=1 // pred_region
      %s26 = ssub.s32 128, 128
      %27 = vsyncadd [#allocation3], %s26
      %s29 = sshll.u32 [#allocation2], 4
      %s30 = int_to_ptr.vmem [resolvable:$true] %s29
      %32 = dma.vmem_to_hbm [thread:$0]  %s30, 128, %s2, [#allocation3]
    $region13: #{tpu_custom_call.1} parent=1 // pred_fallthru
      _
    // Predicated region
    $region14: #{tpu_custom_call.1} parent=1 // pred_check
      _
    $region15: #{tpu_custom_call.1} parent=1 // pred_check_branch
      %34 = sbr.rel (0) target = $region17
    $region16: #{tpu_custom_call.1} parent=1 // pred_region
      %35 = dma.done [#allocation3], 128
    $region17: #{tpu_custom_call.1} parent=1 // pred_fallthru
      _
    %36 = vsyncpa [#allocation3], 1

</llo_original>
